<compile_context>
chip_gen: v7x
topology: tpu7x:2x2x1
jax: 0.10.0
libtpu: 0.0.40
codegen_flags: <defaults>
</compile_context>

<pallas_src>
import jax
import jax.numpy as jnp
from jax.experimental import pallas as pl
from jax.experimental.pallas import tpu as pltpu


_LANE_CANDIDATES = (1024, 512, 256, 128)   # lane-dense last dim -> unmasked vst
_SMALL_FAST_PATH_ELEMS = 128 * 1024        # below this, plain jnp (XLA fuses it for free)
_TILE_BYTES_DEFAULT = 4 * 1024 * 1024      # 4 MiB / operand tile (x3 ops x2 bufs = 24 MiB)
_VMEM_LIMIT_DEFAULT = 32 * 1024 * 1024     # safe on v7x (64 MiB phys) and v5e/v6e


def _velocity_kernel(scal_ref, noise_ref, state_ref, out_ref):
    # SMEM scalars (always f32): [alpha_sqrt, sigma].
    alpha_sqrt = scal_ref[0]
    sigma = scal_ref[1]
    # Compute in f32 (no bf16 VALU on v5e); cast once on the store.
    n = noise_ref[...].astype(jnp.float32)
    s = state_ref[...].astype(jnp.float32)
    out_ref[...] = (alpha_sqrt * n - sigma * s).astype(out_ref.dtype)


def _round_up(x, m):
    return (x + m - 1) // m * m


def _tile_budget():
    """Per-generation tile / scoped-VMEM budget.

    v5e / v6e have 128 MiB physical VMEM -> 8 MiB per-operand tiles (48 MiB
    live) amortize per-step overhead further.  v7x (64 MiB per TC) keeps the
    conservative 4 MiB / 32 MiB defaults.
    """
    tile_bytes, vmem_limit = _TILE_BYTES_DEFAULT, _VMEM_LIMIT_DEFAULT
    try:
        info = pltpu.get_tpu_info()
        if info.vmem_capacity_bytes >= 100 * 1024 * 1024:      # v5e / v6e
            tile_bytes = 8 * 1024 * 1024
            vmem_limit = 64 * 1024 * 1024
    except Exception:
        pass
    return tile_bytes, vmem_limit


def get_velocity(noise, state, alpha_sqrt, sigma):
    """HeadParam.get_velocity: alpha_sqrt * noise - sigma * state.

    `noise` / `state` stand in for the (abstract) get_noise / get_state
    outputs; both share the latent NCHW shape and dtype.
    """
    assert noise.shape == state.shape and noise.dtype == state.dtype
    orig_shape = state.shape
    out_dtype = state.dtype
    total = state.size

    # --- Small-input fast path -------------------------------------------
    # For tiny latents the pallas launch + fixed per-step overhead dominates
    # and XLA's fused elementwise op is already at roofline.  This also means
    # small ragged shapes never touch a pad/slice path.
    if total < _SMALL_FAST_PATH_ELEMS:
        a = jnp.asarray(alpha_sqrt, jnp.float32)
        s = jnp.asarray(sigma, jnp.float32)
        v = a * noise.astype(jnp.float32) - s * state.astype(jnp.float32)
        return v.astype(out_dtype)

    itemsize = jnp.dtype(out_dtype).itemsize
    # Sub-32-bit dtypes pack 2 (bf16) or 4 (int8/fp8) rows per sublane; keep
    # row tiles aligned so vld/vst stay full-width.
    sub = 8 * max(1, 4 // itemsize)

    # Lane-dense last dim picked from *divisors* of `total`: the common
    # NCHW-latent case (plenty of powers of two) needs no padding at all.
    lane = next((l for l in _LANE_CANDIDATES if total % l == 0), None)

    if lane is None:
        # Rare fallback: large total with no multiple-of-128 divisor.
        # TODO(synk): replace with a masked 1-D ragged-tail path to drop the
        #             pad + output-slice HBM copies entirely.
        lane = _LANE_CANDIDATES[0]
        rows = _round_up(pl.cdiv(total, lane), sub)
        padded_total = rows * lane

        def _flatten(x):
            return jnp.pad(x.reshape(-1), (0, padded_total - total)).reshape(rows, lane)
    else:
        rows = total // lane
        padded_total = total

        def _flatten(x):
            return x.reshape(rows, lane)      # free bitcast for contiguous inputs

    tile_bytes, vmem_limit = _tile_budget()
    max_rows = max(sub, (tile_bytes // (lane * itemsize)) // sub * sub)
    # Keep at least 2 grid steps so the "parallel" axis can span v7x's two
    # TensorCores (and so DMA overlaps compute); neutral on v5e/v6e (1 TC).
    two_step_rows = _round_up(pl.cdiv(rows, 2), sub)
    row_tile = min(max_rows, two_step_rows)
    grid = (pl.cdiv(rows, row_tile),)

    noise2d = _flatten(noise)
    state2d = _flatten(state)
    # Scalars stay f32 regardless of latent dtype (SMEM is 32-bit storage).
    scalars = jnp.array([alpha_sqrt, sigma], dtype=jnp.float32)

    out2d = pl.pallas_call(
        _velocity_kernel,
        out_shape=jax.ShapeDtypeStruct((rows, lane), out_dtype),
        grid=grid,
        in_specs=[
            pl.BlockSpec(memory_space=pltpu.SMEM),               # [alpha_sqrt, sigma]
            pl.BlockSpec((row_tile, lane), lambda i: (i, 0)),    # noise tile
            pl.BlockSpec((row_tile, lane), lambda i: (i, 0)),    # state tile
        ],
        out_specs=pl.BlockSpec((row_tile, lane), lambda i: (i, 0)),
        compiler_params=pltpu.CompilerParams(
            # Parallel axis: v7x shards row tiles across its 2 TensorCores.
            dimension_semantics=("parallel",),
            vmem_limit_bytes=vmem_limit,
            # Let XLA fold elementwise producers into the two tensor reads
            # (never into the SMEM scalar operand).
            allow_input_fusion=[False, True, True],
        ),
        # Accurate picture of a pure-bandwidth custom call for XLA's scheduler.
        cost_estimate=pl.CostEstimate(
            flops=3 * padded_total,
            transcendentals=0,
            bytes_accessed=3 * padded_total * itemsize,
        ),
    )(scalars, noise2d, state2d)

    out_flat = out2d.reshape(-1)
    if padded_total != total:
        out_flat = out_flat[:total]
    return out_flat.reshape(orig_shape)


if __name__ == "__main__":
    key = jax.random.PRNGKey(0)
    k1, k2, k3, k4, k5, k6 = jax.random.split(key, 6)

    alpha_sqrt = 0.9
    sigma = 0.435889894354  # sqrt(1 - alpha_sqrt**2)

    # 1) Tiny NCHW latent consistent with a diffusion head -> jnp fast path.
    B, C, H, W = 2, 4, 16, 16
    noise = jax.random.normal(k1, (B, C, H, W), dtype=jnp.float32)   # get_noise(...) result
    state = jax.random.normal(k2, (B, C, H, W), dtype=jnp.float32)   # get_state(...) result
    vel = jax.block_until_ready(get_velocity(noise, state, alpha_sqrt, sigma))
    ref = alpha_sqrt * noise - sigma * state
    assert vel.shape == (B, C, H, W) and vel.dtype == jnp.float32
    assert jnp.allclose(vel, ref, atol=1e-6, rtol=1e-6)

    # 2) Odd ragged bf16 shape -> fast path (no pad/slice HBM traffic at all).
    shp = (2, 3, 17, 23)
    noise_b = jax.random.normal(k3, shp, dtype=jnp.bfloat16)
    state_b = jax.random.normal(k4, shp, dtype=jnp.bfloat16)
    vel_b = jax.block_until_ready(get_velocity(noise_b, state_b, alpha_sqrt, sigma))
    ref_b = (alpha_sqrt * noise_b.astype(jnp.float32)
             - sigma * state_b.astype(jnp.float32)).astype(jnp.bfloat16)
    assert vel_b.shape == shp and vel_b.dtype == jnp.bfloat16
    assert jnp.allclose(vel_b.astype(jnp.float32), ref_b.astype(jnp.float32),
                        atol=2e-2, rtol=2e-2)

    # 3) Pallas path (f32): lane=1024, rows=256, 2-step parallel grid.
    shp_k = (2, 4, 128, 256)
    noise_k = jax.random.normal(k5, shp_k, dtype=jnp.float32)
    state_k = jax.random.normal(k6, shp_k, dtype=jnp.float32)
    vel_k = jax.block_until_ready(get_velocity(noise_k, state_k, alpha_sqrt, sigma))
    ref_k = alpha_sqrt * noise_k - sigma * state_k
    assert vel_k.shape == shp_k and vel_k.dtype == jnp.float32
    assert jnp.allclose(vel_k, ref_k, atol=1e-5, rtol=1e-5)

    # 4) Pallas path (bf16): f32 compute, bf16 store, packed-sublane tiling.
    shp_kb = (2, 8, 128, 128)
    noise_kb = jax.random.normal(k1, shp_kb, dtype=jnp.bfloat16)
    state_kb = jax.random.normal(k2, shp_kb, dtype=jnp.bfloat16)
    vel_kb = jax.block_until_ready(get_velocity(noise_kb, state_kb, alpha_sqrt, sigma))
    ref_kb = (alpha_sqrt * noise_kb.astype(jnp.float32)
              - sigma * state_kb.astype(jnp.float32)).astype(jnp.bfloat16)
    assert vel_kb.shape == shp_kb and vel_kb.dtype == jnp.bfloat16
    assert jnp.allclose(vel_kb.astype(jnp.float32), ref_kb.astype(jnp.float32),
                        atol=2e-2, rtol=2e-2)

    print("KERNEL_OK")
</pallas_src>

<mosaic_0001>
module attributes {stable_mosaic.version = 11 : i64} {
  func.func @_velocity_kernel(%arg0: i32, %arg1: memref<2xf32, #tpu.memory_space<smem>>, %arg2: memref<128x1024xf32, #tpu.memory_space<vmem>>, %arg3: memref<128x1024xf32, #tpu.memory_space<vmem>>, %arg4: memref<128x1024xf32, #tpu.memory_space<vmem>>) attributes {dimension_semantics = [#tpu.dimension_semantics<parallel>], iteration_bounds = array<i64: 2>, scalar_prefetch = 0 : i64, scratch_operands = 0 : i64, tpu.core_type = #tpu.core_type<tc>, window_params = [{transform_indices = @transform_0, window_bounds = array<i64: 2>}, {transform_indices = @transform_1, window_bounds = array<i64: 128, 1024>}, {transform_indices = @transform_2, window_bounds = array<i64: 128, 1024>}, {transform_indices = @transform_3, window_bounds = array<i64: 128, 1024>}]} {
    %c0 = arith.constant 0 : index
    %0 = memref.load %arg1[%c0] : memref<2xf32, #tpu.memory_space<smem>>
    %c1 = arith.constant 1 : index
    %1 = memref.load %arg1[%c1] : memref<2xf32, #tpu.memory_space<smem>>
    %c0_0 = arith.constant 0 : index
    %c0_1 = arith.constant 0 : index
    %2 = vector.load %arg2[%c0_0, %c0_1] : memref<128x1024xf32, #tpu.memory_space<vmem>>, vector<128x1024xf32>
    %c0_2 = arith.constant 0 : index
    %c0_3 = arith.constant 0 : index
    %3 = vector.load %arg3[%c0_2, %c0_3] : memref<128x1024xf32, #tpu.memory_space<vmem>>, vector<128x1024xf32>
    %4 = vector.broadcast %0 : f32 to vector<128x1024xf32>
    %5 = arith.mulf %4, %2 : vector<128x1024xf32>
    %6 = vector.broadcast %1 : f32 to vector<128x1024xf32>
    %7 = arith.mulf %6, %3 : vector<128x1024xf32>
    %8 = arith.subf %5, %7 : vector<128x1024xf32>
    %c0_4 = arith.constant 0 : index
    %c0_5 = arith.constant 0 : index
    %9 = vector.load %arg4[%c0_4, %c0_5] : memref<128x1024xf32, #tpu.memory_space<vmem>>, vector<128x1024xf32>
    tpu.vector_store %arg4[%c0_4, %c0_5], %8 {strides = array<i32>} : memref<128x1024xf32, #tpu.memory_space<vmem>>, vector<128x1024xf32>,
    return
  }
  func.func @transform_0(%arg0: i32) -> i32 {
    %c0_i32 = arith.constant 0 : i32
    %c0_i32_0 = arith.constant 0 : i32
    return %c0_i32 : i32
  }
  func.func @transform_1(%arg0: i32) -> (i32, i32) {
    %c0_i32 = arith.constant 0 : i32
    %c0_i32_0 = arith.constant 0 : i32
    return %arg0, %c0_i32 : i32, i32
  }
  func.func @transform_2(%arg0: i32) -> (i32, i32) {
    %c0_i32 = arith.constant 0 : i32
    %c0_i32_0 = arith.constant 0 : i32
    return %arg0, %c0_i32 : i32, i32
  }
  func.func @transform_3(%arg0: i32) -> (i32, i32) {
    %c0_i32 = arith.constant 0 : i32
    %c0_i32_0 = arith.constant 0 : i32
    return %arg0, %c0_i32 : i32, i32
  }
}

</mosaic_0001>

<llo_original>
// kernel: tpu_custom_call.1
$region0: #{tpu_custom_call.1}
  #allocation0 [shape = 'u32[]', space=smem, size = 0x4, offset = 0x4, fixed_abs, tag = 'smem constant byte address 0x4 - core index']
  #allocation1 [shape = 'u32[144,128]{1,0:T(1,128)}', space=vmem, size = 0x12000, scoped, tag = 'internal scratch']
  %s0 = inlined_call_operand.hbm [shape: f32[2], index: 0, kind: input, shape index: {}]
  %s1 = inlined_call_operand.hbm [shape: f32[256,1024], index: 1, kind: input, shape index: {}]
  %s2 = inlined_call_operand.hbm [shape: f32[256,1024], index: 2, kind: input, shape index: {}]
  %s3 = inlined_call_operand.hbm [shape: f32[256,1024], index: 3, kind: output, shape index: {}]
  %s4 = sld [smem:[#allocation0]]
  $region57: #{tpu_custom_call.1} parent=0
    _
  %s6 = ssub.s32 1, %s4
  %s7 = scalar_select 0, %s6, %s4
  $region1: #{tpu_custom_call.1} parent=0
    #allocation2 [shape = 'u8[512]{0}', space=smem, size = 0x200, scoped, tag = 'input window, operand 0, single buffered']
    #allocation3 [shape = 's32[2]{0}', space=sflag, size = 0x8, scoped, tag = 'scoped memory for tpu_custom_call.1']
    #allocation4 [shape = 's32[2]{0}', space=sflag, size = 0x8, scoped, tag = 'scoped memory for tpu_custom_call.1']
    #allocation5 [shape = 's32[2]{0}', space=sflag, size = 0x8, scoped, tag = 'scoped memory for tpu_custom_call.1']
    #allocation6 [shape = 'u8[1048576]{0}', space=vmem, size = 0x100000, scoped, tag = 'input window, operand 1']
    #allocation7 [shape = 'u8[1048576]{0}', space=vmem, size = 0x100000, scoped, tag = 'input window, operand 2']
    #allocation8 [shape = 's32[2]{0}', space=sflag, size = 0x8, scoped, tag = 'scoped memory for tpu_custom_call.1']
    #allocation9 [shape = 'u8[1048576]{0}', space=vmem, size = 0x100000, scoped, tag = 'output window, operand 0']
    %8 = vsyncpa [#allocation5], 0
    %9 = vsyncpa [#allocation3], 0
    %s10 = scalar_lea.sflag [#allocation3], 1
    %11 = vsyncpa %s10, 0
    %12 = vsyncpa [#allocation8], 0
    %s13 = scalar_lea.sflag [#allocation8], 1
    %14 = vsyncpa %s13, 0
    %15 = vsyncpa [#allocation4], 0
    %s16 = scalar_lea.sflag [#allocation4], 1
    %17 = vsyncpa %s16, 0
    loop: start=0, step=1, limit=4
    $region2: #{tpu_custom_call.1} parent=1 // loop_pre_header
      _
    $region3: #{tpu_custom_call.1} parent=1 // loop_header
      %s19 = sphi 0, %s23
      %p20 = scmp.ge.s32.totalorder %s19, 4
      %s27 = sphi 0, %s27
      %s29 = sphi 0, %s27
      %s30 = sphi 0, %s29
      %s44 = sphi 0, %s30
      %s50 = sphi 0, %s52
      %s53 = sphi 0, %s50
      %s54 = sphi 0, %s53
      %s70 = sphi 0, %s54
      %s76 = sphi 0, %s78
      %s79 = sphi 0, %s76
      %s80 = sphi 0, %s79
      %s96 = sphi 0, %s80
      %s102 = sphi 0, %s104
      %s105 = sphi 0, %s102
      %s106 = sphi 0, %s105
      %s122 = sphi 0, %s106
    $region4: #{tpu_custom_call.1} parent=1 // loop_header_branch
      %22 = sbr.rel (%p20) target = $region8
    $region5: #{tpu_custom_call.1} parent=1 // loop_body
      %s24 = ssub.s32 %s19, 1
      %s25 = ssub.s32 %s19, 2
      %s26 = sadd.s32 %s19, 1
      %s28 = sadd.s32 %s27, 1
      %p31 = scmp.eq.s32.totalorder %s19, 1
      %p32 = scmp.ne.s32.totalorder %s27, %s29
      %p33 = scmp.eq.s32.totalorder %s19, 0
      %p34 = por %p32, %p33
      %p35 = scmp.ne.s32.totalorder %s27, %s29
      %p36 = scmp.eq.s32.totalorder %s24, 1
      %p37 = por %p35, %p36
      %p38 = scmp.ne.s32.totalorder %s29, %s30
      %p39 = scmp.eq.s32.totalorder %s24, 0
      %p40 = por %p38, %p39
      %p41 = scmp.ne.s32.totalorder %s29, %s30
      %p42 = scmp.eq.s32.totalorder %s25, 1
      %p43 = por %p41, %p42
      %p45 = scmp.ne.s32.totalorder %s30, %s44
      %p46 = scmp.eq.s32.totalorder %s25, 0
      %p47 = por %p45, %p46
      %s48 = ssub.s32 %s19, %s26
      %p49 = scmp.eq.s32.totalorder %s48, 0
      %s51 = sadd.s32 %s50, 1
      %s52 = scalar_select %p49, %s50, %s51
      %p55 = pneg %p49
      %p56 = scmp.eq.s32.totalorder %s19, 1
      %p57 = por %p55, %p56
      %p58 = scmp.ne.s32.totalorder %s50, %s53
      %p59 = scmp.eq.s32.totalorder %s19, 0
      %p60 = por %p58, %p59
      %p61 = scmp.ne.s32.totalorder %s50, %s53
      %p62 = scmp.eq.s32.totalorder %s24, 1
      %p63 = por %p61, %p62
      %p64 = scmp.ne.s32.totalorder %s53, %s54
      %p65 = scmp.eq.s32.totalorder %s24, 0
      %p66 = por %p64, %p65
      %p67 = scmp.ne.s32.totalorder %s53, %s54
      %p68 = scmp.eq.s32.totalorder %s25, 1
      %p69 = por %p67, %p68
      %p71 = scmp.ne.s32.totalorder %s54, %s70
      %p72 = scmp.eq.s32.totalorder %s25, 0
      %p73 = por %p71, %p72
      %s74 = ssub.s32 %s19, %s26
      %p75 = scmp.eq.s32.totalorder %s74, 0
      %s77 = sadd.s32 %s76, 1
      %s78 = scalar_select %p75, %s76, %s77
      %p81 = pneg %p75
      %p82 = scmp.eq.s32.totalorder %s19, 1
      %p83 = por %p81, %p82
      %p84 = scmp.ne.s32.totalorder %s76, %s79
      %p85 = scmp.eq.s32.totalorder %s19, 0
      %p86 = por %p84, %p85
      %p87 = scmp.ne.s32.totalorder %s76, %s79
      %p88 = scmp.eq.s32.totalorder %s24, 1
      %p89 = por %p87, %p88
      %p90 = scmp.ne.s32.totalorder %s79, %s80
      %p91 = scmp.eq.s32.totalorder %s24, 0
      %p92 = por %p90, %p91
      %p93 = scmp.ne.s32.totalorder %s79, %s80
      %p94 = scmp.eq.s32.totalorder %s25, 1
      %p95 = por %p93, %p94
      %p97 = scmp.ne.s32.totalorder %s80, %s96
      %p98 = scmp.eq.s32.totalorder %s25, 0
      %p99 = por %p97, %p98
      %s100 = ssub.s32 %s19, %s26
      %p101 = scmp.eq.s32.totalorder %s100, 0
      %s103 = sadd.s32 %s102, 1
      %s104 = scalar_select %p101, %s102, %s103
      %p107 = pneg %p101
      %p108 = scmp.eq.s32.totalorder %s19, 1
      %p109 = por %p107, %p108
      %p110 = scmp.ne.s32.totalorder %s102, %s105
      %p111 = scmp.eq.s32.totalorder %s19, 0
      %p112 = por %p110, %p111
      %p113 = scmp.ne.s32.totalorder %s102, %s105
      %p114 = scmp.eq.s32.totalorder %s24, 1
      %p115 = por %p113, %p114
      %p116 = scmp.ne.s32.totalorder %s105, %s106
      %p117 = scmp.eq.s32.totalorder %s24, 0
      %p118 = por %p116, %p117
      %p119 = scmp.ne.s32.totalorder %s105, %s106
      %p120 = scmp.eq.s32.totalorder %s25, 1
      %p121 = por %p119, %p120
      %p123 = scmp.ne.s32.totalorder %s106, %s122
      %p124 = scmp.eq.s32.totalorder %s25, 0
      %p125 = por %p123, %p124
      %p126 = scmp.le.s32.totalorder 1, %s19
      %p127 = scmp.lt.s32.totalorder %s19, 3
      %p128 = pnand %p126, %p127
      %p129 = pneg %p128
      // Predicated region
      $region9: #{tpu_custom_call.1} parent=5 // pred_check
        _
      $region10: #{tpu_custom_call.1} parent=5 // pred_check_branch
        %131 = sbr.rel (%p128) target = $region12
      $region11: #{tpu_custom_call.1} parent=5 // pred_region
        %s132 = ssub.s32 %s19, 1
        // Predicated region
        $region13: #{tpu_custom_call.1} parent=11 // pred_check
          %p133 = pneg %p40
        $region14: #{tpu_custom_call.1} parent=11 // pred_check_branch
          %135 = sbr.rel (%p133) target = $region16
        $region15: #{tpu_custom_call.1} parent=11 // pred_region
          %s137 = ssub.s32 16, 16
          %138 = vsyncadd [#allocation5], %s137
          %141 = dma.hbm_to_smem %s0, 16, [#allocation2], [#allocation5]
        $region16: #{tpu_custom_call.1} parent=11 // pred_fallthru
          _
      $region12: #{tpu_custom_call.1} parent=5 // pred_fallthru
        _
      %p142 = scmp.lt.s32.totalorder %s19, 2
      // Predicated region
      $region17: #{tpu_custom_call.1} parent=5 // pred_check
        %p143 = pneg %p142
      $region18: #{tpu_custom_call.1} parent=5 // pred_check_branch
        %145 = sbr.rel (%p143) target = $region20
      $region19: #{tpu_custom_call.1} parent=5 // pred_region
        // Predicated region
        $region21: #{tpu_custom_call.1} parent=19 // pred_check
          %p146 = pneg %p60
        $region22: #{tpu_custom_call.1} parent=19 // pred_check_branch
          %148 = sbr.rel (%p146) target = $region24
        $region23: #{tpu_custom_call.1} parent=19 // pred_region
          %s149 = sand.u32 %s50, 1
          %s150 = scalar_lea.sflag [#allocation3], %s149
          %s151 = sand.u32 %s50, 1
          %s152 = smul.addr %s151, 1024
          %s153 = scalar_lea.vmem [#allocation6], %s152
          %s154 = smul.u32 16, %s19
          %s156 = ssub.s32 16384, 16384
          %157 = vsyncadd %s150, %s156
          %s158 = smul.addr %s154, 8
          %s159 = smul.addr %s158, 128
          %s160 = scalar_lea.hbm %s1, %s159
          %s161 = sshll.u32 %s153, 4
          %s162 = int_to_ptr.vmem [resolvable:$true] %s161
          %167 = dma.hbm_to_vmem [thread:$0]  %s160, 16384, %s162, %s150, 1024, 1024, 64
        $region24: #{tpu_custom_call.1} parent=19 // pred_fallthru
          _
        // Predicated region
        $region25: #{tpu_custom_call.1} parent=19 // pred_check
          %p168 = pneg %p86
        $region26: #{tpu_custom_call.1} parent=19 // pred_check_branch
          %170 = sbr.rel (%p168) target = $region28
        $region27: #{tpu_custom_call.1} parent=19 // pred_region
          %s171 = sand.u32 %s76, 1
          %s172 = scalar_lea.sflag [#allocation8], %s171
          %s173 = sand.u32 %s76, 1
          %s174 = smul.addr %s173, 1024
          %s175 = scalar_lea.vmem [#allocation7], %s174
          %s176 = smul.u32 16, %s19
          %s178 = ssub.s32 16384, 16384
          %179 = vsyncadd %s172, %s178
          %s180 = smul.addr %s176, 8
          %s181 = smul.addr %s180, 128
          %s182 = scalar_lea.hbm %s2, %s181
          %s183 = sshll.u32 %s175, 4
          %s184 = int_to_ptr.vmem [resolvable:$true] %s183
          %189 = dma.hbm_to_vmem [thread:$0]  %s182, 16384, %s184, %s172, 1024, 1024, 64
        $region28: #{tpu_custom_call.1} parent=19 // pred_fallthru
          _
      $region20: #{tpu_custom_call.1} parent=5 // pred_fallthru
        _
      %p190 = scmp.le.s32.totalorder 1, %s19
      %p191 = scmp.lt.s32.totalorder %s19, 3
      %p192 = pnand %p190, %p191
      %p193 = pneg %p192
      // Predicated region
      $region29: #{tpu_custom_call.1} parent=5 // pred_check
        _
      $region30: #{tpu_custom_call.1} parent=5 // pred_check_branch
        %195 = sbr.rel (%p192) target = $region32
      $region31: #{tpu_custom_call.1} parent=5 // pred_region
        %s196 = ssub.s32 %s19, 1
        // Predicated region
        $region33: #{tpu_custom_call.1} parent=31 // pred_check
          %p197 = pneg %p40
        $region34: #{tpu_custom_call.1} parent=31 // pred_check_branch
          %199 = sbr.rel (%p197) target = $region36
        $region35: #{tpu_custom_call.1} parent=31 // pred_region
          %200 = dma.done [#allocation5], 16
        $region36: #{tpu_custom_call.1} parent=31 // pred_fallthru
          _
        %s201 = sand.u32 %s53, 1
        %s202 = scalar_lea.sflag [#allocation3], %s201
        %s203 = sand.u32 %s53, 1
        %s204 = smul.addr %s203, 1024
        %s205 = scalar_lea.vmem [#allocation6], %s204
        // Predicated region
        $region37: #{tpu_custom_call.1} parent=31 // pred_check
          %p206 = pneg %p66
        $region38: #{tpu_custom_call.1} parent=31 // pred_check_branch
          %208 = sbr.rel (%p206) target = $region40
        $region39: #{tpu_custom_call.1} parent=31 // pred_region
          %209 = dma.done %s202, 16384
        $region40: #{tpu_custom_call.1} parent=31 // pred_fallthru
          _
        %s210 = sand.u32 %s79, 1
        %s211 = scalar_lea.sflag [#allocation8], %s210
        %s212 = sand.u32 %s79, 1
        %s213 = smul.addr %s212, 1024
        %s214 = scalar_lea.vmem [#allocation7], %s213
        // Predicated region
        $region41: #{tpu_custom_call.1} parent=31 // pred_check
          %p215 = pneg %p92
        $region42: #{tpu_custom_call.1} parent=31 // pred_check_branch
          %217 = sbr.rel (%p215) target = $region44
        $region43: #{tpu_custom_call.1} parent=31 // pred_region
          %218 = dma.done %s211, 16384
        $region44: #{tpu_custom_call.1} parent=31 // pred_fallthru
          _
        %219 = sfence
        %p220 = pneg %p40
        %p221 = pneg %p37
        %s222 = sand.u32 %s53, 1
        %s223 = scalar_lea.sflag [#allocation3], %s222
        %s224 = sand.u32 %s53, 1
        %s225 = smul.addr %s224, 1024
        %s226 = scalar_lea.vmem [#allocation6], %s225
        %p227 = pneg %p66
        %p228 = pneg %p63
        %s229 = sand.u32 %s79, 1
        %s230 = scalar_lea.sflag [#allocation8], %s229
        %s231 = sand.u32 %s79, 1
        %s232 = smul.addr %s231, 1024
        %s233 = scalar_lea.vmem [#allocation7], %s232
        %p234 = pneg %p92
        %p235 = pneg %p89
        %p236 = pneg %p118
        %p237 = pneg %p115
        %s238 = sand.u32 %s105, 1
        %s239 = scalar_lea.sflag [#allocation4], %s238
        %s240 = sand.u32 %s105, 1
        %s241 = smul.addr %s240, 1024
        %s242 = scalar_lea.vmem [#allocation9], %s241
        %s243 = smul.u32 16, %s24
        %s244 = smul.u32 16, %s24
        %s245 = smul.u32 16, %s24
        %s246 = sld [smem:[#allocation2]]
        %s247 = sld [smem:[#allocation2 + $0x1]]
        %v248 = vld [vmem:[%s205] sm:$0xff]
        %v249 = vld [vmem:[%s205 + $0x8] sm:$0xff]
        %v250 = vld [vmem:[%s205 + $0x10] sm:$0xff]
        %v251 = vld [vmem:[%s205 + $0x18] sm:$0xff]
        %v252 = vld [vmem:[%s205 + $0x20] sm:$0xff]
        %v253 = vld [vmem:[%s205 + $0x28] sm:$0xff]
        %v254 = vld [vmem:[%s205 + $0x30] sm:$0xff]
        %v255 = vld [vmem:[%s205 + $0x38] sm:$0xff]
        %v256 = vld [vmem:[%s205 + $0x40] sm:$0xff]
        %v257 = vld [vmem:[%s205 + $0x48] sm:$0xff]
        %v258 = vld [vmem:[%s205 + $0x50] sm:$0xff]
        %v259 = vld [vmem:[%s205 + $0x58] sm:$0xff]
        %v260 = vld [vmem:[%s205 + $0x60] sm:$0xff]
        %v261 = vld [vmem:[%s205 + $0x68] sm:$0xff]
        %v262 = vld [vmem:[%s205 + $0x70] sm:$0xff]
        %v263 = vld [vmem:[%s205 + $0x78] sm:$0xff]
        %v264 = vld [vmem:[%s205 + $0x80] sm:$0xff]
        %v265 = vld [vmem:[%s205 + $0x88] sm:$0xff]
        %v266 = vld [vmem:[%s205 + $0x90] sm:$0xff]
        %v267 = vld [vmem:[%s205 + $0x98] sm:$0xff]
        %v268 = vld [vmem:[%s205 + $0xa0] sm:$0xff]
        %v269 = vld [vmem:[%s205 + $0xa8] sm:$0xff]
        %v270 = vld [vmem:[%s205 + $0xb0] sm:$0xff]
        %v271 = vld [vmem:[%s205 + $0xb8] sm:$0xff]
        %v272 = vld [vmem:[%s205 + $0xc0] sm:$0xff]
        %v273 = vld [vmem:[%s205 + $0xc8] sm:$0xff]
        %v274 = vld [vmem:[%s205 + $0xd0] sm:$0xff]
        %v275 = vld [vmem:[%s205 + $0xd8] sm:$0xff]
        %v276 = vld [vmem:[%s205 + $0xe0] sm:$0xff]
        %v277 = vld [vmem:[%s205 + $0xe8] sm:$0xff]
        %v278 = vld [vmem:[%s205 + $0xf0] sm:$0xff]
        %v279 = vld [vmem:[%s205 + $0xf8] sm:$0xff]
        %v280 = vld [vmem:[%s205 + $0x100] sm:$0xff]
        %v281 = vld [vmem:[%s205 + $0x108] sm:$0xff]
        %v282 = vld [vmem:[%s205 + $0x110] sm:$0xff]
        %v283 = vld [vmem:[%s205 + $0x118] sm:$0xff]
        %v284 = vld [vmem:[%s205 + $0x120] sm:$0xff]
        %v285 = vld [vmem:[%s205 + $0x128] sm:$0xff]
        %v286 = vld [vmem:[%s205 + $0x130] sm:$0xff]
        %v287 = vld [vmem:[%s205 + $0x138] sm:$0xff]
        %v288 = vld [vmem:[%s205 + $0x140] sm:$0xff]
        %v289 = vld [vmem:[%s205 + $0x148] sm:$0xff]
        %v290 = vld [vmem:[%s205 + $0x150] sm:$0xff]
        %v291 = vld [vmem:[%s205 + $0x158] sm:$0xff]
        %v292 = vld [vmem:[%s205 + $0x160] sm:$0xff]
        %v293 = vld [vmem:[%s205 + $0x168] sm:$0xff]
        %v294 = vld [vmem:[%s205 + $0x170] sm:$0xff]
        %v295 = vld [vmem:[%s205 + $0x178] sm:$0xff]
        %v296 = vld [vmem:[%s205 + $0x180] sm:$0xff]
        %v297 = vld [vmem:[%s205 + $0x188] sm:$0xff]
        %v298 = vld [vmem:[%s205 + $0x190] sm:$0xff]
        %v299 = vld [vmem:[%s205 + $0x198] sm:$0xff]
        %v300 = vld [vmem:[%s205 + $0x1a0] sm:$0xff]
        %v301 = vld [vmem:[%s205 + $0x1a8] sm:$0xff]
        %v302 = vld [vmem:[%s205 + $0x1b0] sm:$0xff]
        %v303 = vld [vmem:[%s205 + $0x1b8] sm:$0xff]
        %v304 = vld [vmem:[%s205 + $0x1c0] sm:$0xff]
        %v305 = vld [vmem:[%s205 + $0x1c8] sm:$0xff]
        %v306 = vld [vmem:[%s205 + $0x1d0] sm:$0xff]
        %v307 = vld [vmem:[%s205 + $0x1d8] sm:$0xff]
        %v308 = vld [vmem:[%s205 + $0x1e0] sm:$0xff]
        %v309 = vld [vmem:[%s205 + $0x1e8] sm:$0xff]
        %v310 = vld [vmem:[%s205 + $0x1f0] sm:$0xff]
        %v311 = vld [vmem:[%s205 + $0x1f8] sm:$0xff]
        %v312 = vld [vmem:[%s205 + $0x200] sm:$0xff]
        %v313 = vld [vmem:[%s205 + $0x208] sm:$0xff]
        %v314 = vld [vmem:[%s205 + $0x210] sm:$0xff]
        %v315 = vld [vmem:[%s205 + $0x218] sm:$0xff]
        %v316 = vld [vmem:[%s205 + $0x220] sm:$0xff]
        %v317 = vld [vmem:[%s205 + $0x228] sm:$0xff]
        %v318 = vld [vmem:[%s205 + $0x230] sm:$0xff]
        %v319 = vld [vmem:[%s205 + $0x238] sm:$0xff]
        %v320 = vld [vmem:[%s205 + $0x240] sm:$0xff]
        %v321 = vld [vmem:[%s205 + $0x248] sm:$0xff]
        %v322 = vld [vmem:[%s205 + $0x250] sm:$0xff]
        %v323 = vld [vmem:[%s205 + $0x258] sm:$0xff]
        %v324 = vld [vmem:[%s205 + $0x260] sm:$0xff]
        %v325 = vld [vmem:[%s205 + $0x268] sm:$0xff]
        %v326 = vld [vmem:[%s205 + $0x270] sm:$0xff]
        %v327 = vld [vmem:[%s205 + $0x278] sm:$0xff]
        %v328 = vld [vmem:[%s205 + $0x280] sm:$0xff]
        %v329 = vld [vmem:[%s205 + $0x288] sm:$0xff]
        %v330 = vld [vmem:[%s205 + $0x290] sm:$0xff]
        %v331 = vld [vmem:[%s205 + $0x298] sm:$0xff]
        %v332 = vld [vmem:[%s205 + $0x2a0] sm:$0xff]
        %v333 = vld [vmem:[%s205 + $0x2a8] sm:$0xff]
        %v334 = vld [vmem:[%s205 + $0x2b0] sm:$0xff]
        %v335 = vld [vmem:[%s205 + $0x2b8] sm:$0xff]
        %v336 = vld [vmem:[%s205 + $0x2c0] sm:$0xff]
        %v337 = vld [vmem:[%s205 + $0x2c8] sm:$0xff]
        %v338 = vld [vmem:[%s205 + $0x2d0] sm:$0xff]
        %v339 = vld [vmem:[%s205 + $0x2d8] sm:$0xff]
        %v340 = vld [vmem:[%s205 + $0x2e0] sm:$0xff]
        %v341 = vld [vmem:[%s205 + $0x2e8] sm:$0xff]
        %v342 = vld [vmem:[%s205 + $0x2f0] sm:$0xff]
        %v343 = vld [vmem:[%s205 + $0x2f8] sm:$0xff]
        %v344 = vld [vmem:[%s205 + $0x300] sm:$0xff]
        %v345 = vld [vmem:[%s205 + $0x308] sm:$0xff]
        %v346 = vld [vmem:[%s205 + $0x310] sm:$0xff]
        %v347 = vld [vmem:[%s205 + $0x318] sm:$0xff]
        %v348 = vld [vmem:[%s205 + $0x320] sm:$0xff]
        %v349 = vld [vmem:[%s205 + $0x328] sm:$0xff]
        %v350 = vld [vmem:[%s205 + $0x330] sm:$0xff]
        %v351 = vld [vmem:[%s205 + $0x338] sm:$0xff]
        %v352 = vld [vmem:[%s205 + $0x340] sm:$0xff]
        %v353 = vld [vmem:[%s205 + $0x348] sm:$0xff]
        %v354 = vld [vmem:[%s205 + $0x350] sm:$0xff]
        %v355 = vld [vmem:[%s205 + $0x358] sm:$0xff]
        %v356 = vld [vmem:[%s205 + $0x360] sm:$0xff]
        %v357 = vld [vmem:[%s205 + $0x368] sm:$0xff]
        %v358 = vld [vmem:[%s205 + $0x370] sm:$0xff]
        %v359 = vld [vmem:[%s205 + $0x378] sm:$0xff]
        %v360 = vld [vmem:[%s205 + $0x380] sm:$0xff]
        %v361 = vld [vmem:[%s205 + $0x388] sm:$0xff]
        %v362 = vld [vmem:[%s205 + $0x390] sm:$0xff]
        %v363 = vld [vmem:[%s205 + $0x398] sm:$0xff]
        %v364 = vld [vmem:[%s205 + $0x3a0] sm:$0xff]
        %v365 = vld [vmem:[%s205 + $0x3a8] sm:$0xff]
        %v366 = vld [vmem:[%s205 + $0x3b0] sm:$0xff]
        %v367 = vld [vmem:[%s205 + $0x3b8] sm:$0xff]
        %v368 = vld [vmem:[%s205 + $0x3c0] sm:$0xff]
        %v369 = vld [vmem:[%s205 + $0x3c8] sm:$0xff]
        %v370 = vld [vmem:[%s205 + $0x3d0] sm:$0xff]
        %v371 = vld [vmem:[%s205 + $0x3d8] sm:$0xff]
        %v372 = vld [vmem:[%s205 + $0x3e0] sm:$0xff]
        %v373 = vld [vmem:[%s205 + $0x3e8] sm:$0xff]
        %v374 = vld [vmem:[%s205 + $0x3f0] sm:$0xff]
        %v375 = vld [vmem:[%s205 + $0x3f8] sm:$0xff]
        %v376 = vld [vmem:[%s214] sm:$0xff]
        %v377 = vld [vmem:[%s214 + $0x8] sm:$0xff]
        %v378 = vld [vmem:[%s214 + $0x10] sm:$0xff]
        %v379 = vld [vmem:[%s214 + $0x18] sm:$0xff]
        %v380 = vld [vmem:[%s214 + $0x20] sm:$0xff]
        %v381 = vld [vmem:[%s214 + $0x28] sm:$0xff]
        %v382 = vld [vmem:[%s214 + $0x30] sm:$0xff]
        %v383 = vld [vmem:[%s214 + $0x38] sm:$0xff]
        %v384 = vld [vmem:[%s214 + $0x40] sm:$0xff]
        %v385 = vld [vmem:[%s214 + $0x48] sm:$0xff]
        %v386 = vld [vmem:[%s214 + $0x50] sm:$0xff]
        %v387 = vld [vmem:[%s214 + $0x58] sm:$0xff]
        %v388 = vld [vmem:[%s214 + $0x60] sm:$0xff]
        %v389 = vld [vmem:[%s214 + $0x68] sm:$0xff]
        %v390 = vld [vmem:[%s214 + $0x70] sm:$0xff]
        %v391 = vld [vmem:[%s214 + $0x78] sm:$0xff]
        %v392 = vld [vmem:[%s214 + $0x80] sm:$0xff]
        %v393 = vld [vmem:[%s214 + $0x88] sm:$0xff]
        %v394 = vld [vmem:[%s214 + $0x90] sm:$0xff]
        %v395 = vld [vmem:[%s214 + $0x98] sm:$0xff]
        %v396 = vld [vmem:[%s214 + $0xa0] sm:$0xff]
        %v397 = vld [vmem:[%s214 + $0xa8] sm:$0xff]
        %v398 = vld [vmem:[%s214 + $0xb0] sm:$0xff]
        %v399 = vld [vmem:[%s214 + $0xb8] sm:$0xff]
        %v400 = vld [vmem:[%s214 + $0xc0] sm:$0xff]
        %v401 = vld [vmem:[%s214 + $0xc8] sm:$0xff]
        %v402 = vld [vmem:[%s214 + $0xd0] sm:$0xff]
        %v403 = vld [vmem:[%s214 + $0xd8] sm:$0xff]
        %v404 = vld [vmem:[%s214 + $0xe0] sm:$0xff]
        %v405 = vld [vmem:[%s214 + $0xe8] sm:$0xff]
        %v406 = vld [vmem:[%s214 + $0xf0] sm:$0xff]
        %v407 = vld [vmem:[%s214 + $0xf8] sm:$0xff]
        %v408 = vld [vmem:[%s214 + $0x100] sm:$0xff]
        %v409 = vld [vmem:[%s214 + $0x108] sm:$0xff]
        %v410 = vld [vmem:[%s214 + $0x110] sm:$0xff]
        %v411 = vld [vmem:[%s214 + $0x118] sm:$0xff]
        %v412 = vld [vmem:[%s214 + $0x120] sm:$0xff]
        %v413 = vld [vmem:[%s214 + $0x128] sm:$0xff]
        %v414 = vld [vmem:[%s214 + $0x130] sm:$0xff]
        %v415 = vld [vmem:[%s214 + $0x138] sm:$0xff]
        %v416 = vld [vmem:[%s214 + $0x140] sm:$0xff]
        %v417 = vld [vmem:[%s214 + $0x148] sm:$0xff]
        %v418 = vld [vmem:[%s214 + $0x150] sm:$0xff]
        %v419 = vld [vmem:[%s214 + $0x158] sm:$0xff]
        %v420 = vld [vmem:[%s214 + $0x160] sm:$0xff]
        %v421 = vld [vmem:[%s214 + $0x168] sm:$0xff]
        %v422 = vld [vmem:[%s214 + $0x170] sm:$0xff]
        %v423 = vld [vmem:[%s214 + $0x178] sm:$0xff]
        %v424 = vld [vmem:[%s214 + $0x180] sm:$0xff]
        %v425 = vld [vmem:[%s214 + $0x188] sm:$0xff]
        %v426 = vld [vmem:[%s214 + $0x190] sm:$0xff]
        %v427 = vld [vmem:[%s214 + $0x198] sm:$0xff]
        %v428 = vld [vmem:[%s214 + $0x1a0] sm:$0xff]
        %v429 = vld [vmem:[%s214 + $0x1a8] sm:$0xff]
        %v430 = vld [vmem:[%s214 + $0x1b0] sm:$0xff]
        %v431 = vld [vmem:[%s214 + $0x1b8] sm:$0xff]
        %v432 = vld [vmem:[%s214 + $0x1c0] sm:$0xff]
        %v433 = vld [vmem:[%s214 + $0x1c8] sm:$0xff]
        %v434 = vld [vmem:[%s214 + $0x1d0] sm:$0xff]
        %v435 = vld [vmem:[%s214 + $0x1d8] sm:$0xff]
        %v436 = vld [vmem:[%s214 + $0x1e0] sm:$0xff]
        %v437 = vld [vmem:[%s214 + $0x1e8] sm:$0xff]
        %v438 = vld [vmem:[%s214 + $0x1f0] sm:$0xff]
        %v439 = vld [vmem:[%s214 + $0x1f8] sm:$0xff]
        %v440 = vld [vmem:[%s214 + $0x200] sm:$0xff]
        %v441 = vld [vmem:[%s214 + $0x208] sm:$0xff]
        %v442 = vld [vmem:[%s214 + $0x210] sm:$0xff]
        %v443 = vld [vmem:[%s214 + $0x218] sm:$0xff]
        %v444 = vld [vmem:[%s214 + $0x220] sm:$0xff]
        %v445 = vld [vmem:[%s214 + $0x228] sm:$0xff]
        %v446 = vld [vmem:[%s214 + $0x230] sm:$0xff]
        %v447 = vld [vmem:[%s214 + $0x238] sm:$0xff]
        %v448 = vld [vmem:[%s214 + $0x240] sm:$0xff]
        %v449 = vld [vmem:[%s214 + $0x248] sm:$0xff]
        %v450 = vld [vmem:[%s214 + $0x250] sm:$0xff]
        %v451 = vld [vmem:[%s214 + $0x258] sm:$0xff]
        %v452 = vld [vmem:[%s214 + $0x260] sm:$0xff]
        %v453 = vld [vmem:[%s214 + $0x268] sm:$0xff]
        %v454 = vld [vmem:[%s214 + $0x270] sm:$0xff]
        %v455 = vld [vmem:[%s214 + $0x278] sm:$0xff]
        %v456 = vld [vmem:[%s214 + $0x280] sm:$0xff]
        %v457 = vld [vmem:[%s214 + $0x288] sm:$0xff]
        %v458 = vld [vmem:[%s214 + $0x290] sm:$0xff]
        %v459 = vld [vmem:[%s214 + $0x298] sm:$0xff]
        %v460 = vld [vmem:[%s214 + $0x2a0] sm:$0xff]
        %v461 = vld [vmem:[%s214 + $0x2a8] sm:$0xff]
        %v462 = vld [vmem:[%s214 + $0x2b0] sm:$0xff]
        %v463 = vld [vmem:[%s214 + $0x2b8] sm:$0xff]
        %v464 = vld [vmem:[%s214 + $0x2c0] sm:$0xff]
        %v465 = vld [vmem:[%s214 + $0x2c8] sm:$0xff]
        %v466 = vld [vmem:[%s214 + $0x2d0] sm:$0xff]
        %v467 = vld [vmem:[%s214 + $0x2d8] sm:$0xff]
        %v468 = vld [vmem:[%s214 + $0x2e0] sm:$0xff]
        %v469 = vld [vmem:[%s214 + $0x2e8] sm:$0xff]
        %v470 = vld [vmem:[%s214 + $0x2f0] sm:$0xff]
        %v471 = vld [vmem:[%s214 + $0x2f8] sm:$0xff]
        %v472 = vld [vmem:[%s214 + $0x300] sm:$0xff]
        %v473 = vld [vmem:[%s214 + $0x308] sm:$0xff]
        %v474 = vld [vmem:[%s214 + $0x310] sm:$0xff]
        %v475 = vld [vmem:[%s214 + $0x318] sm:$0xff]
        %v476 = vld [vmem:[%s214 + $0x320] sm:$0xff]
        %v477 = vld [vmem:[%s214 + $0x328] sm:$0xff]
        %v478 = vld [vmem:[%s214 + $0x330] sm:$0xff]
        %v479 = vld [vmem:[%s214 + $0x338] sm:$0xff]
        %v480 = vld [vmem:[%s214 + $0x340] sm:$0xff]
        %v481 = vld [vmem:[%s214 + $0x348] sm:$0xff]
        %v482 = vld [vmem:[%s214 + $0x350] sm:$0xff]
        %v483 = vld [vmem:[%s214 + $0x358] sm:$0xff]
        %v484 = vld [vmem:[%s214 + $0x360] sm:$0xff]
        %v485 = vld [vmem:[%s214 + $0x368] sm:$0xff]
        %v486 = vld [vmem:[%s214 + $0x370] sm:$0xff]
        %v487 = vld [vmem:[%s214 + $0x378] sm:$0xff]
        %v488 = vld [vmem:[%s214 + $0x380] sm:$0xff]
        %v489 = vld [vmem:[%s214 + $0x388] sm:$0xff]
        %v490 = vld [vmem:[%s214 + $0x390] sm:$0xff]
        %v491 = vld [vmem:[%s214 + $0x398] sm:$0xff]
        %v492 = vld [vmem:[%s214 + $0x3a0] sm:$0xff]
        %v493 = vld [vmem:[%s214 + $0x3a8] sm:$0xff]
        %v494 = vld [vmem:[%s214 + $0x3b0] sm:$0xff]
        %v495 = vld [vmem:[%s214 + $0x3b8] sm:$0xff]
        %v496 = vld [vmem:[%s214 + $0x3c0] sm:$0xff]
        %v497 = vld [vmem:[%s214 + $0x3c8] sm:$0xff]
        %v498 = vld [vmem:[%s214 + $0x3d0] sm:$0xff]
        %v499 = vld [vmem:[%s214 + $0x3d8] sm:$0xff]
        %v500 = vld [vmem:[%s214 + $0x3e0] sm:$0xff]
        %v501 = vld [vmem:[%s214 + $0x3e8] sm:$0xff]
        %v502 = vld [vmem:[%s214 + $0x3f0] sm:$0xff]
        %v503 = vld [vmem:[%s214 + $0x3f8] sm:$0xff]
        %v504 = vstv %s246
        %v505 = vmul.f32 %v504, %v248
        %v506 = vmul.f32 %v504, %v249
        %v507 = vmul.f32 %v504, %v250
        %v508 = vmul.f32 %v504, %v251
        %v509 = vmul.f32 %v504, %v252
        %v510 = vmul.f32 %v504, %v253
        %v511 = vmul.f32 %v504, %v254
        %v512 = vmul.f32 %v504, %v255
        %v513 = vmul.f32 %v504, %v256
        %v514 = vmul.f32 %v504, %v257
        %v515 = vmul.f32 %v504, %v258
        %v516 = vmul.f32 %v504, %v259
        %v517 = vmul.f32 %v504, %v260
        %v518 = vmul.f32 %v504, %v261
        %v519 = vmul.f32 %v504, %v262
        %v520 = vmul.f32 %v504, %v263
        %v521 = vmul.f32 %v504, %v264
        %v522 = vmul.f32 %v504, %v265
        %v523 = vmul.f32 %v504, %v266
        %v524 = vmul.f32 %v504, %v267
        %v525 = vmul.f32 %v504, %v268
        %v526 = vmul.f32 %v504, %v269
        %v527 = vmul.f32 %v504, %v270
        %v528 = vmul.f32 %v504, %v271
        %v529 = vmul.f32 %v504, %v272
        %v530 = vmul.f32 %v504, %v273
        %v531 = vmul.f32 %v504, %v274
        %v532 = vmul.f32 %v504, %v275
        %v533 = vmul.f32 %v504, %v276
        %v534 = vmul.f32 %v504, %v277
        %v535 = vmul.f32 %v504, %v278
        %v536 = vmul.f32 %v504, %v279
        %v537 = vmul.f32 %v504, %v280
        %v538 = vmul.f32 %v504, %v281
        %v539 = vmul.f32 %v504, %v282
        %v540 = vmul.f32 %v504, %v283
        %v541 = vmul.f32 %v504, %v284
        %v542 = vmul.f32 %v504, %v285
        %v543 = vmul.f32 %v504, %v286
        %v544 = vmul.f32 %v504, %v287
        %v545 = vmul.f32 %v504, %v288
        %v546 = vmul.f32 %v504, %v289
        %v547 = vmul.f32 %v504, %v290
        %v548 = vmul.f32 %v504, %v291
        %v549 = vmul.f32 %v504, %v292
        %v550 = vmul.f32 %v504, %v293
        %v551 = vmul.f32 %v504, %v294
        %v552 = vmul.f32 %v504, %v295
        %v553 = vmul.f32 %v504, %v296
        %v554 = vmul.f32 %v504, %v297
        %v555 = vmul.f32 %v504, %v298
        %v556 = vmul.f32 %v504, %v299
        %v557 = vmul.f32 %v504, %v300
        %v558 = vmul.f32 %v504, %v301
        %v559 = vmul.f32 %v504, %v302
        %v560 = vmul.f32 %v504, %v303
        %v561 = vmul.f32 %v504, %v304
        %v562 = vmul.f32 %v504, %v305
        %v563 = vmul.f32 %v504, %v306
        %v564 = vmul.f32 %v504, %v307
        %v565 = vmul.f32 %v504, %v308
        %v566 = vmul.f32 %v504, %v309
        %v567 = vmul.f32 %v504, %v310
        %v568 = vmul.f32 %v504, %v311
        %v569 = vmul.f32 %v504, %v312
        %v570 = vmul.f32 %v504, %v313
        %v571 = vmul.f32 %v504, %v314
        %v572 = vmul.f32 %v504, %v315
        %v573 = vmul.f32 %v504, %v316
        %v574 = vmul.f32 %v504, %v317
        %v575 = vmul.f32 %v504, %v318
        %v576 = vmul.f32 %v504, %v319
        %v577 = vmul.f32 %v504, %v320
        %v578 = vmul.f32 %v504, %v321
        %v579 = vmul.f32 %v504, %v322
        %v580 = vmul.f32 %v504, %v323
        %v581 = vmul.f32 %v504, %v324
        %v582 = vmul.f32 %v504, %v325
        %v583 = vmul.f32 %v504, %v326
        %v584 = vmul.f32 %v504, %v327
        %v585 = vmul.f32 %v504, %v328
        %v586 = vmul.f32 %v504, %v329
        %v587 = vmul.f32 %v504, %v330
        %v588 = vmul.f32 %v504, %v331
        %v589 = vmul.f32 %v504, %v332
        %v590 = vmul.f32 %v504, %v333
        %v591 = vmul.f32 %v504, %v334
        %v592 = vmul.f32 %v504, %v335
        %v593 = vmul.f32 %v504, %v336
        %v594 = vmul.f32 %v504, %v337
        %v595 = vmul.f32 %v504, %v338
        %v596 = vmul.f32 %v504, %v339
        %v597 = vmul.f32 %v504, %v340
        %v598 = vmul.f32 %v504, %v341
        %v599 = vmul.f32 %v504, %v342
        %v600 = vmul.f32 %v504, %v343
        %v601 = vmul.f32 %v504, %v344
        %v602 = vmul.f32 %v504, %v345
        %v603 = vmul.f32 %v504, %v346
        %v604 = vmul.f32 %v504, %v347
        %v605 = vmul.f32 %v504, %v348
        %v606 = vmul.f32 %v504, %v349
        %v607 = vmul.f32 %v504, %v350
        %v608 = vmul.f32 %v504, %v351
        %v609 = vmul.f32 %v504, %v352
        %v610 = vmul.f32 %v504, %v353
        %v611 = vmul.f32 %v504, %v354
        %v612 = vmul.f32 %v504, %v355
        %v613 = vmul.f32 %v504, %v356
        %v614 = vmul.f32 %v504, %v357
        %v615 = vmul.f32 %v504, %v358
        %v616 = vmul.f32 %v504, %v359
        %v617 = vmul.f32 %v504, %v360
        %v618 = vmul.f32 %v504, %v361
        %v619 = vmul.f32 %v504, %v362
        %v620 = vmul.f32 %v504, %v363
        %v621 = vmul.f32 %v504, %v364
        %v622 = vmul.f32 %v504, %v365
        %v623 = vmul.f32 %v504, %v366
        %v624 = vmul.f32 %v504, %v367
        %v625 = vmul.f32 %v504, %v368
        %v626 = vmul.f32 %v504, %v369
        %v627 = vmul.f32 %v504, %v370
        %v628 = vmul.f32 %v504, %v371
        %v629 = vmul.f32 %v504, %v372
        %v630 = vmul.f32 %v504, %v373
        %v631 = vmul.f32 %v504, %v374
        %v632 = vmul.f32 %v504, %v375
        %v633 = vstv %s247
        %v634 = vmul.f32 %v633, %v376
        %v635 = vmul.f32 %v633, %v377
        %v636 = vmul.f32 %v633, %v378
        %v637 = vmul.f32 %v633, %v379
        %v638 = vmul.f32 %v633, %v380
        %v639 = vmul.f32 %v633, %v381
        %v640 = vmul.f32 %v633, %v382
        %v641 = vmul.f32 %v633, %v383
        %v642 = vmul.f32 %v633, %v384
        %v643 = vmul.f32 %v633, %v385
        %v644 = vmul.f32 %v633, %v386
        %v645 = vmul.f32 %v633, %v387
        %v646 = vmul.f32 %v633, %v388
        %v647 = vmul.f32 %v633, %v389
        %v648 = vmul.f32 %v633, %v390
        %v649 = vmul.f32 %v633, %v391
        %v650 = vmul.f32 %v633, %v392
        %v651 = vmul.f32 %v633, %v393
        %v652 = vmul.f32 %v633, %v394
        %v653 = vmul.f32 %v633, %v395
        %v654 = vmul.f32 %v633, %v396
        %v655 = vmul.f32 %v633, %v397
        %v656 = vmul.f32 %v633, %v398
        %v657 = vmul.f32 %v633, %v399
        %v658 = vmul.f32 %v633, %v400
        %v659 = vmul.f32 %v633, %v401
        %v660 = vmul.f32 %v633, %v402
        %v661 = vmul.f32 %v633, %v403
        %v662 = vmul.f32 %v633, %v404
        %v663 = vmul.f32 %v633, %v405
        %v664 = vmul.f32 %v633, %v406
        %v665 = vmul.f32 %v633, %v407
        %v666 = vmul.f32 %v633, %v408
        %v667 = vmul.f32 %v633, %v409
        %v668 = vmul.f32 %v633, %v410
        %v669 = vmul.f32 %v633, %v411
        %v670 = vmul.f32 %v633, %v412
        %v671 = vmul.f32 %v633, %v413
        %v672 = vmul.f32 %v633, %v414
        %v673 = vmul.f32 %v633, %v415
        %v674 = vmul.f32 %v633, %v416
        %v675 = vmul.f32 %v633, %v417
        %v676 = vmul.f32 %v633, %v418
        %v677 = vmul.f32 %v633, %v419
        %v678 = vmul.f32 %v633, %v420
        %v679 = vmul.f32 %v633, %v421
        %v680 = vmul.f32 %v633, %v422
        %v681 = vmul.f32 %v633, %v423
        %v682 = vmul.f32 %v633, %v424
        %v683 = vmul.f32 %v633, %v425
        %v684 = vmul.f32 %v633, %v426
        %v685 = vmul.f32 %v633, %v427
        %v686 = vmul.f32 %v633, %v428
        %v687 = vmul.f32 %v633, %v429
        %v688 = vmul.f32 %v633, %v430
        %v689 = vmul.f32 %v633, %v431
        %v690 = vmul.f32 %v633, %v432
        %v691 = vmul.f32 %v633, %v433
        %v692 = vmul.f32 %v633, %v434
        %v693 = vmul.f32 %v633, %v435
        %v694 = vmul.f32 %v633, %v436
        %v695 = vmul.f32 %v633, %v437
        %v696 = vmul.f32 %v633, %v438
        %v697 = vmul.f32 %v633, %v439
        %v698 = vmul.f32 %v633, %v440
        %v699 = vmul.f32 %v633, %v441
        %v700 = vmul.f32 %v633, %v442
        %v701 = vmul.f32 %v633, %v443
        %v702 = vmul.f32 %v633, %v444
        %v703 = vmul.f32 %v633, %v445
        %v704 = vmul.f32 %v633, %v446
        %v705 = vmul.f32 %v633, %v447
        %v706 = vmul.f32 %v633, %v448
        %v707 = vmul.f32 %v633, %v449
        %v708 = vmul.f32 %v633, %v450
        %v709 = vmul.f32 %v633, %v451
        %v710 = vmul.f32 %v633, %v452
        %v711 = vmul.f32 %v633, %v453
        %v712 = vmul.f32 %v633, %v454
        %v713 = vmul.f32 %v633, %v455
        %v714 = vmul.f32 %v633, %v456
        %v715 = vmul.f32 %v633, %v457
        %v716 = vmul.f32 %v633, %v458
        %v717 = vmul.f32 %v633, %v459
        %v718 = vmul.f32 %v633, %v460
        %v719 = vmul.f32 %v633, %v461
        %v720 = vmul.f32 %v633, %v462
        %v721 = vmul.f32 %v633, %v463
        %v722 = vmul.f32 %v633, %v464
        %v723 = vmul.f32 %v633, %v465
        %v724 = vmul.f32 %v633, %v466
        %v725 = vmul.f32 %v633, %v467
        %v726 = vmul.f32 %v633, %v468
        %v727 = vmul.f32 %v633, %v469
        %v728 = vmul.f32 %v633, %v470
        %v729 = vmul.f32 %v633, %v471
        %v730 = vmul.f32 %v633, %v472
        %v731 = vmul.f32 %v633, %v473
        %v732 = vmul.f32 %v633, %v474
        %v733 = vmul.f32 %v633, %v475
        %v734 = vmul.f32 %v633, %v476
        %v735 = vmul.f32 %v633, %v477
        %v736 = vmul.f32 %v633, %v478
        %v737 = vmul.f32 %v633, %v479
        %v738 = vmul.f32 %v633, %v480
        %v739 = vmul.f32 %v633, %v481
        %v740 = vmul.f32 %v633, %v482
        %v741 = vmul.f32 %v633, %v483
        %v742 = vmul.f32 %v633, %v484
        %v743 = vmul.f32 %v633, %v485
        %v744 = vmul.f32 %v633, %v486
        %v745 = vmul.f32 %v633, %v487
        %v746 = vmul.f32 %v633, %v488
        %v747 = vmul.f32 %v633, %v489
        %v748 = vmul.f32 %v633, %v490
        %v749 = vmul.f32 %v633, %v491
        %v750 = vmul.f32 %v633, %v492
        %v751 = vmul.f32 %v633, %v493
        %v752 = vmul.f32 %v633, %v494
        %v753 = vmul.f32 %v633, %v495
        %v754 = vmul.f32 %v633, %v496
        %v755 = vmul.f32 %v633, %v497
        %v756 = vmul.f32 %v633, %v498
        %v757 = vmul.f32 %v633, %v499
        %v758 = vmul.f32 %v633, %v500
        %v759 = vmul.f32 %v633, %v501
        %v760 = vmul.f32 %v633, %v502
        %v761 = vmul.f32 %v633, %v503
        %v762 = vsub.f32 %v505, %v634
        %v763 = vsub.f32 %v506, %v635
        %v764 = vsub.f32 %v507, %v636
        %v765 = vsub.f32 %v508, %v637
        %v766 = vsub.f32 %v509, %v638
        %v767 = vsub.f32 %v510, %v639
        %v768 = vsub.f32 %v511, %v640
        %v769 = vsub.f32 %v512, %v641
        %v770 = vsub.f32 %v513, %v642
        %v771 = vsub.f32 %v514, %v643
        %v772 = vsub.f32 %v515, %v644
        %v773 = vsub.f32 %v516, %v645
        %v774 = vsub.f32 %v517, %v646
        %v775 = vsub.f32 %v518, %v647
        %v776 = vsub.f32 %v519, %v648
        %v777 = vsub.f32 %v520, %v649
        %v778 = vsub.f32 %v521, %v650
        %v779 = vsub.f32 %v522, %v651
        %v780 = vsub.f32 %v523, %v652
        %v781 = vsub.f32 %v524, %v653
        %v782 = vsub.f32 %v525, %v654
        %v783 = vsub.f32 %v526, %v655
        %v784 = vsub.f32 %v527, %v656
        %v785 = vsub.f32 %v528, %v657
        %v786 = vsub.f32 %v529, %v658
        %v787 = vsub.f32 %v530, %v659
        %v788 = vsub.f32 %v531, %v660
        %v789 = vsub.f32 %v532, %v661
        %v790 = vsub.f32 %v533, %v662
        %v791 = vsub.f32 %v534, %v663
        %v792 = vsub.f32 %v535, %v664
        %v793 = vsub.f32 %v536, %v665
        %v794 = vsub.f32 %v537, %v666
        %v795 = vsub.f32 %v538, %v667
        %v796 = vsub.f32 %v539, %v668
        %v797 = vsub.f32 %v540, %v669
        %v798 = vsub.f32 %v541, %v670
        %v799 = vsub.f32 %v542, %v671
        %v800 = vsub.f32 %v543, %v672
        %v801 = vsub.f32 %v544, %v673
        %v802 = vsub.f32 %v545, %v674
        %v803 = vsub.f32 %v546, %v675
        %v804 = vsub.f32 %v547, %v676
        %v805 = vsub.f32 %v548, %v677
        %v806 = vsub.f32 %v549, %v678
        %v807 = vsub.f32 %v550, %v679
        %v808 = vsub.f32 %v551, %v680
        %v809 = vsub.f32 %v552, %v681
        %v810 = vsub.f32 %v553, %v682
        %v811 = vsub.f32 %v554, %v683
        %v812 = vsub.f32 %v555, %v684
        %v813 = vsub.f32 %v556, %v685
        %v814 = vsub.f32 %v557, %v686
        %v815 = vsub.f32 %v558, %v687
        %v816 = vsub.f32 %v559, %v688
        %v817 = vsub.f32 %v560, %v689
        %v818 = vsub.f32 %v561, %v690
        %v819 = vsub.f32 %v562, %v691
        %v820 = vsub.f32 %v563, %v692
        %v821 = vsub.f32 %v564, %v693
        %v822 = vsub.f32 %v565, %v694
        %v823 = vsub.f32 %v566, %v695
        %v824 = vsub.f32 %v567, %v696
        %v825 = vsub.f32 %v568, %v697
        %v826 = vsub.f32 %v569, %v698
        %v827 = vsub.f32 %v570, %v699
        %v828 = vsub.f32 %v571, %v700
        %v829 = vsub.f32 %v572, %v701
        %v830 = vsub.f32 %v573, %v702
        %v831 = vsub.f32 %v574, %v703
        %v832 = vsub.f32 %v575, %v704
        %v833 = vsub.f32 %v576, %v705
        %v834 = vsub.f32 %v577, %v706
        %v835 = vsub.f32 %v578, %v707
        %v836 = vsub.f32 %v579, %v708
        %v837 = vsub.f32 %v580, %v709
        %v838 = vsub.f32 %v581, %v710
        %v839 = vsub.f32 %v582, %v711
        %v840 = vsub.f32 %v583, %v712
        %v841 = vsub.f32 %v584, %v713
        %v842 = vsub.f32 %v585, %v714
        %v843 = vsub.f32 %v586, %v715
        %v844 = vsub.f32 %v587, %v716
        %v845 = vsub.f32 %v588, %v717
        %v846 = vsub.f32 %v589, %v718
        %v847 = vsub.f32 %v590, %v719
        %v848 = vsub.f32 %v591, %v720
        %v849 = vsub.f32 %v592, %v721
        %v850 = vsub.f32 %v593, %v722
        %v851 = vsub.f32 %v594, %v723
        %v852 = vsub.f32 %v595, %v724
        %v853 = vsub.f32 %v596, %v725
        %v854 = vsub.f32 %v597, %v726
        %v855 = vsub.f32 %v598, %v727
        %v856 = vsub.f32 %v599, %v728
        %v857 = vsub.f32 %v600, %v729
        %v858 = vsub.f32 %v601, %v730
        %v859 = vsub.f32 %v602, %v731
        %v860 = vsub.f32 %v603, %v732
        %v861 = vsub.f32 %v604, %v733
        %v862 = vsub.f32 %v605, %v734
        %v863 = vsub.f32 %v606, %v735
        %v864 = vsub.f32 %v607, %v736
        %v865 = vsub.f32 %v608, %v737
        %v866 = vsub.f32 %v609, %v738
        %v867 = vsub.f32 %v610, %v739
        %v868 = vsub.f32 %v611, %v740
        %v869 = vsub.f32 %v612, %v741
        %v870 = vsub.f32 %v613, %v742
        %v871 = vsub.f32 %v614, %v743
        %v872 = vsub.f32 %v615, %v744
        %v873 = vsub.f32 %v616, %v745
        %v874 = vsub.f32 %v617, %v746
        %v875 = vsub.f32 %v618, %v747
        %v876 = vsub.f32 %v619, %v748
        %v877 = vsub.f32 %v620, %v749
        %v878 = vsub.f32 %v621, %v750
        %v879 = vsub.f32 %v622, %v751
        %v880 = vsub.f32 %v623, %v752
        %v881 = vsub.f32 %v624, %v753
        %v882 = vsub.f32 %v625, %v754
        %v883 = vsub.f32 %v626, %v755
        %v884 = vsub.f32 %v627, %v756
        %v885 = vsub.f32 %v628, %v757
        %v886 = vsub.f32 %v629, %v758
        %v887 = vsub.f32 %v630, %v759
        %v888 = vsub.f32 %v631, %v760
        %v889 = vsub.f32 %v632, %v761
        %890 = vst [vmem:[%s242] sm:$0xff] %v762
        %891 = vst [vmem:[%s242 + $0x8] sm:$0xff] %v763
        %892 = vst [vmem:[%s242 + $0x10] sm:$0xff] %v764
        %893 = vst [vmem:[%s242 + $0x18] sm:$0xff] %v765
        %894 = vst [vmem:[%s242 + $0x20] sm:$0xff] %v766
        %895 = vst [vmem:[%s242 + $0x28] sm:$0xff] %v767
        %896 = vst [vmem:[%s242 + $0x30] sm:$0xff] %v768
        %897 = vst [vmem:[%s242 + $0x38] sm:$0xff] %v769
        %898 = vst [vmem:[%s242 + $0x40] sm:$0xff] %v770
        %899 = vst [vmem:[%s242 + $0x48] sm:$0xff] %v771
        %900 = vst [vmem:[%s242 + $0x50] sm:$0xff] %v772
        %901 = vst [vmem:[%s242 + $0x58] sm:$0xff] %v773
        %902 = vst [vmem:[%s242 + $0x60] sm:$0xff] %v774
        %903 = vst [vmem:[%s242 + $0x68] sm:$0xff] %v775
        %904 = vst [vmem:[%s242 + $0x70] sm:$0xff] %v776
        %905 = vst [vmem:[%s242 + $0x78] sm:$0xff] %v777
        %906 = vst [vmem:[%s242 + $0x80] sm:$0xff] %v778
        %907 = vst [vmem:[%s242 + $0x88] sm:$0xff] %v779
        %908 = vst [vmem:[%s242 + $0x90] sm:$0xff] %v780
        %909 = vst [vmem:[%s242 + $0x98] sm:$0xff] %v781
        %910 = vst [vmem:[%s242 + $0xa0] sm:$0xff] %v782
        %911 = vst [vmem:[%s242 + $0xa8] sm:$0xff] %v783
        %912 = vst [vmem:[%s242 + $0xb0] sm:$0xff] %v784
        %913 = vst [vmem:[%s242 + $0xb8] sm:$0xff] %v785
        %914 = vst [vmem:[%s242 + $0xc0] sm:$0xff] %v786
        %915 = vst [vmem:[%s242 + $0xc8] sm:$0xff] %v787
        %916 = vst [vmem:[%s242 + $0xd0] sm:$0xff] %v788
        %917 = vst [vmem:[%s242 + $0xd8] sm:$0xff] %v789
        %918 = vst [vmem:[%s242 + $0xe0] sm:$0xff] %v790
        %919 = vst [vmem:[%s242 + $0xe8] sm:$0xff] %v791
        %920 = vst [vmem:[%s242 + $0xf0] sm:$0xff] %v792
        %921 = vst [vmem:[%s242 + $0xf8] sm:$0xff] %v793
        %922 = vst [vmem:[%s242 + $0x100] sm:$0xff] %v794
        %923 = vst [vmem:[%s242 + $0x108] sm:$0xff] %v795
        %924 = vst [vmem:[%s242 + $0x110] sm:$0xff] %v796
        %925 = vst [vmem:[%s242 + $0x118] sm:$0xff] %v797
        %926 = vst [vmem:[%s242 + $0x120] sm:$0xff] %v798
        %927 = vst [vmem:[%s242 + $0x128] sm:$0xff] %v799
        %928 = vst [vmem:[%s242 + $0x130] sm:$0xff] %v800
        %929 = vst [vmem:[%s242 + $0x138] sm:$0xff] %v801
        %930 = vst [vmem:[%s242 + $0x140] sm:$0xff] %v802
        %931 = vst [vmem:[%s242 + $0x148] sm:$0xff] %v803
        %932 = vst [vmem:[%s242 + $0x150] sm:$0xff] %v804
        %933 = vst [vmem:[%s242 + $0x158] sm:$0xff] %v805
        %934 = vst [vmem:[%s242 + $0x160] sm:$0xff] %v806
        %935 = vst [vmem:[%s242 + $0x168] sm:$0xff] %v807
        %936 = vst [vmem:[%s242 + $0x170] sm:$0xff] %v808
        %937 = vst [vmem:[%s242 + $0x178] sm:$0xff] %v809
        %938 = vst [vmem:[%s242 + $0x180] sm:$0xff] %v810
        %939 = vst [vmem:[%s242 + $0x188] sm:$0xff] %v811
        %940 = vst [vmem:[%s242 + $0x190] sm:$0xff] %v812
        %941 = vst [vmem:[%s242 + $0x198] sm:$0xff] %v813
        %942 = vst [vmem:[%s242 + $0x1a0] sm:$0xff] %v814
        %943 = vst [vmem:[%s242 + $0x1a8] sm:$0xff] %v815
        %944 = vst [vmem:[%s242 + $0x1b0] sm:$0xff] %v816
        %945 = vst [vmem:[%s242 + $0x1b8] sm:$0xff] %v817
        %946 = vst [vmem:[%s242 + $0x1c0] sm:$0xff] %v818
        %947 = vst [vmem:[%s242 + $0x1c8] sm:$0xff] %v819
        %948 = vst [vmem:[%s242 + $0x1d0] sm:$0xff] %v820
        %949 = vst [vmem:[%s242 + $0x1d8] sm:$0xff] %v821
        %950 = vst [vmem:[%s242 + $0x1e0] sm:$0xff] %v822
        %951 = vst [vmem:[%s242 + $0x1e8] sm:$0xff] %v823
        %952 = vst [vmem:[%s242 + $0x1f0] sm:$0xff] %v824
        %953 = vst [vmem:[%s242 + $0x1f8] sm:$0xff] %v825
        %954 = vst [vmem:[%s242 + $0x200] sm:$0xff] %v826
        %955 = vst [vmem:[%s242 + $0x208] sm:$0xff] %v827
        %956 = vst [vmem:[%s242 + $0x210] sm:$0xff] %v828
        %957 = vst [vmem:[%s242 + $0x218] sm:$0xff] %v829
        %958 = vst [vmem:[%s242 + $0x220] sm:$0xff] %v830
        %959 = vst [vmem:[%s242 + $0x228] sm:$0xff] %v831
        %960 = vst [vmem:[%s242 + $0x230] sm:$0xff] %v832
        %961 = vst [vmem:[%s242 + $0x238] sm:$0xff] %v833
        %962 = vst [vmem:[%s242 + $0x240] sm:$0xff] %v834
        %963 = vst [vmem:[%s242 + $0x248] sm:$0xff] %v835
        %964 = vst [vmem:[%s242 + $0x250] sm:$0xff] %v836
        %965 = vst [vmem:[%s242 + $0x258] sm:$0xff] %v837
        %966 = vst [vmem:[%s242 + $0x260] sm:$0xff] %v838
        %967 = vst [vmem:[%s242 + $0x268] sm:$0xff] %v839
        %968 = vst [vmem:[%s242 + $0x270] sm:$0xff] %v840
        %969 = vst [vmem:[%s242 + $0x278] sm:$0xff] %v841
        %970 = vst [vmem:[%s242 + $0x280] sm:$0xff] %v842
        %971 = vst [vmem:[%s242 + $0x288] sm:$0xff] %v843
        %972 = vst [vmem:[%s242 + $0x290] sm:$0xff] %v844
        %973 = vst [vmem:[%s242 + $0x298] sm:$0xff] %v845
        %974 = vst [vmem:[%s242 + $0x2a0] sm:$0xff] %v846
        %975 = vst [vmem:[%s242 + $0x2a8] sm:$0xff] %v847
        %976 = vst [vmem:[%s242 + $0x2b0] sm:$0xff] %v848
        %977 = vst [vmem:[%s242 + $0x2b8] sm:$0xff] %v849
        %978 = vst [vmem:[%s242 + $0x2c0] sm:$0xff] %v850
        %979 = vst [vmem:[%s242 + $0x2c8] sm:$0xff] %v851
        %980 = vst [vmem:[%s242 + $0x2d0] sm:$0xff] %v852
        %981 = vst [vmem:[%s242 + $0x2d8] sm:$0xff] %v853
        %982 = vst [vmem:[%s242 + $0x2e0] sm:$0xff] %v854
        %983 = vst [vmem:[%s242 + $0x2e8] sm:$0xff] %v855
        %984 = vst [vmem:[%s242 + $0x2f0] sm:$0xff] %v856
        %985 = vst [vmem:[%s242 + $0x2f8] sm:$0xff] %v857
        %986 = vst [vmem:[%s242 + $0x300] sm:$0xff] %v858
        %987 = vst [vmem:[%s242 + $0x308] sm:$0xff] %v859
        %988 = vst [vmem:[%s242 + $0x310] sm:$0xff] %v860
        %989 = vst [vmem:[%s242 + $0x318] sm:$0xff] %v861
        %990 = vst [vmem:[%s242 + $0x320] sm:$0xff] %v862
        %991 = vst [vmem:[%s242 + $0x328] sm:$0xff] %v863
        %992 = vst [vmem:[%s242 + $0x330] sm:$0xff] %v864
        %993 = vst [vmem:[%s242 + $0x338] sm:$0xff] %v865
        %994 = vst [vmem:[%s242 + $0x340] sm:$0xff] %v866
        %995 = vst [vmem:[%s242 + $0x348] sm:$0xff] %v867
        %996 = vst [vmem:[%s242 + $0x350] sm:$0xff] %v868
        %997 = vst [vmem:[%s242 + $0x358] sm:$0xff] %v869
        %998 = vst [vmem:[%s242 + $0x360] sm:$0xff] %v870
        %999 = vst [vmem:[%s242 + $0x368] sm:$0xff] %v871
        %1000 = vst [vmem:[%s242 + $0x370] sm:$0xff] %v872
        %1001 = vst [vmem:[%s242 + $0x378] sm:$0xff] %v873
        %1002 = vst [vmem:[%s242 + $0x380] sm:$0xff] %v874
        %1003 = vst [vmem:[%s242 + $0x388] sm:$0xff] %v875
        %1004 = vst [vmem:[%s242 + $0x390] sm:$0xff] %v876
        %1005 = vst [vmem:[%s242 + $0x398] sm:$0xff] %v877
        %1006 = vst [vmem:[%s242 + $0x3a0] sm:$0xff] %v878
        %1007 = vst [vmem:[%s242 + $0x3a8] sm:$0xff] %v879
        %1008 = vst [vmem:[%s242 + $0x3b0] sm:$0xff] %v880
        %1009 = vst [vmem:[%s242 + $0x3b8] sm:$0xff] %v881
        %1010 = vst [vmem:[%s242 + $0x3c0] sm:$0xff] %v882
        %1011 = vst [vmem:[%s242 + $0x3c8] sm:$0xff] %v883
        %1012 = vst [vmem:[%s242 + $0x3d0] sm:$0xff] %v884
        %1013 = vst [vmem:[%s242 + $0x3d8] sm:$0xff] %v885
        %1014 = vst [vmem:[%s242 + $0x3e0] sm:$0xff] %v886
        %1015 = vst [vmem:[%s242 + $0x3e8] sm:$0xff] %v887
        %1016 = vst [vmem:[%s242 + $0x3f0] sm:$0xff] %v888
        %1017 = vst [vmem:[%s242 + $0x3f8] sm:$0xff] %v889
        %s1018 = sand.u32 %s105, 1
        %s1019 = scalar_lea.sflag [#allocation4], %s1018
        %s1020 = sand.u32 %s105, 1
        %s1021 = smul.addr %s1020, 1024
        %s1022 = scalar_lea.vmem [#allocation9], %s1021
        // Predicated region
        $region45: #{tpu_custom_call.1} parent=31 // pred_check
          %p1023 = pneg %p115
        $region46: #{tpu_custom_call.1} parent=31 // pred_check_branch
          %1025 = sbr.rel (%p1023) target = $region48
        $region47: #{tpu_custom_call.1} parent=31 // pred_region
          %s1026 = smul.u32 16, %s24
          %s1028 = ssub.s32 16384, 16384
          %1029 = vsyncadd %s1019, %s1028
          %s1030 = smul.addr %s1026, 8
          %s1031 = smul.addr %s1030, 128
          %s1032 = scalar_lea.hbm %s3, %s1031
          %s1033 = sshll.u32 %s1022, 4
          %s1034 = int_to_ptr.vmem [resolvable:$true] %s1033
          %1039 = dma.vmem_to_hbm [thread:$0]  %s1034, 16384, %s1032, %s1019, 1024, 1024, 64
        $region48: #{tpu_custom_call.1} parent=31 // pred_fallthru
          _
      $region32: #{tpu_custom_call.1} parent=5 // pred_fallthru
        _
      %p1040 = scmp.le.s32.totalorder 2, %s19
      // Predicated region
      $region49: #{tpu_custom_call.1} parent=5 // pred_check
        %p1041 = pneg %p1040
      $region50: #{tpu_custom_call.1} parent=5 // pred_check_branch
        %1043 = sbr.rel (%p1041) target = $region52
      $region51: #{tpu_custom_call.1} parent=5 // pred_region
        %s1044 = ssub.s32 %s19, 2
        // Predicated region
        $region53: #{tpu_custom_call.1} parent=51 // pred_check
          %p1045 = pneg %p121
        $region54: #{tpu_custom_call.1} parent=51 // pred_check_branch
          %1047 = sbr.rel (%p1045) target = $region56
        $region55: #{tpu_custom_call.1} parent=51 // pred_region
          %s1048 = sand.u32 %s106, 1
          %s1049 = scalar_lea.sflag [#allocation4], %s1048
          %s1050 = sand.u32 %s106, 1
          %s1051 = smul.addr %s1050, 1024
          %s1052 = scalar_lea.vmem [#allocation9], %s1051
          %1053 = dma.done %s1049, 16384
        $region56: #{tpu_custom_call.1} parent=51 // pred_fallthru
          _
      $region52: #{tpu_custom_call.1} parent=5 // pred_fallthru
        _
    $region6: #{tpu_custom_call.1} parent=1 // loop_footer
      %s23 = sadd.s32 1, %s19
    $region7: #{tpu_custom_call.1} parent=1 // loop_footer_branch
      %18 = sbr.rel target = $region3
    $region8: #{tpu_custom_call.1} parent=1 // loop_exit
      _
    %1054 = vsyncpa [#allocation3], 1
    %s1055 = scalar_lea.sflag [#allocation3], 1
    %1056 = vsyncpa %s1055, 1
    %1057 = vsyncpa [#allocation8], 1
    %s1058 = scalar_lea.sflag [#allocation8], 1
    %1059 = vsyncpa %s1058, 1
    %1060 = vsyncpa [#allocation4], 1
    %s1061 = scalar_lea.sflag [#allocation4], 1
    %1062 = vsyncpa %s1061, 1
    %1063 = vsyncpa [#allocation5], 1
    %s1064 = scalar_lea.sflag [#allocation5], 1
    %1065 = vsyncpa %s1064, 1

</llo_original>
